<compile_context>
chip_gen: v5e
topology: v5e:2x2
jax: 0.10.0
libtpu: 0.0.40
codegen_flags: <defaults>
</compile_context>

<pallas_src>
import functools

import jax
import jax.numpy as jnp
import numpy as np
from jax.experimental import pallas as pl
from jax.experimental.pallas import tpu as pltpu

SEQ_LEN = 118          # fixed by LayerNorm(118) in the PyTorch module
LANE_LEN = 128         # lane-padded time length (TPU lane width)
LRELU_SLOPE = 0.01     # torch.nn.LeakyReLU default
LN_EPS = 1e-5          # torch.nn.LayerNorm default


# ------------------------------ fused kernel --------------------------------
def _tcn_fused_kernel(*refs, layer_cfg, K, L, LP, B_T):
    """All TemporalBlocks for one batch tile.

    refs = [x_slab, (w_flat, b, gamma_slab, beta_slab[, wd, bd]) per layer, out]
      x_slab     : (C0, B_T*LP)   lane-dense input slab (pad lanes zero)
      w_flat     : (C_out, K*C_in) conv taps, tap-major columns
      b          : (C_out, 1)
      gamma_slab : (1, B_T*LP)    LayerNorm gamma tiled per batch segment
      beta_slab  : (1, B_T*LP)
      wd, bd     : 1x1 downsample (only present when C_in != C_out)
      out        : (C_last, B_T*LP)
    """
    x_ref = refs[0]
    o_ref = refs[-1]
    prefs = refs[1:-1]

    f32 = jnp.float32
    N = B_T * LP
    inv_L = 1.0 / L

    # local time index within each 128-lane batch segment
    local = jax.lax.broadcasted_iota(jnp.int32, (1, N), 1) & (LP - 1)
    valid = local < L                                        # (1, N) bool
    lane128 = jax.lax.broadcasted_iota(jnp.int32, (1, LP), 1)
    seg_validf = (lane128 < L).astype(f32)                   # (1, LP)

    h = x_ref[...].astype(f32)                               # (C0, N)

    p = 0
    for dilation, has_down in layer_cfg:
        w = prefs[p][...].astype(f32)                        # (C_out, K*C_in)
        b = prefs[p + 1][...].astype(f32)                    # (C_out, 1)
        g = prefs[p + 2][...].astype(f32)                    # (1, N)
        beta = prefs[p + 3][...].astype(f32)                 # (1, N)
        p += 4
        if has_down:
            wd = prefs[p][...].astype(f32)                   # (C_out, C_in)
            bd = prefs[p + 1][...].astype(f32)               # (C_out, 1)
            p += 2

        # ---- causal dilated conv: ONE (C_out, K*C_in) @ (K*C_in, N) matmul.
        # Tap j needs x[t - (K-1-j)*d]; the right-shift is a lane roll plus a
        # mask that zeroes lanes t < shift (the causal left padding).  Pad
        # lanes [L, LP) of h are zero, so the roll never leaks real data
        # across batch segments.
        parts = []
        for j in range(K):
            s = (K - 1 - j) * dilation
            if s == 0:
                parts.append(h)
            elif s >= LP:            # tap only ever reads the causal zero pad
                parts.append(jnp.zeros_like(h))
            else:
                r = pltpu.roll(h, shift=s, axis=1)
                parts.append(jnp.where(local >= s, r, 0.0))
        xk = jnp.concatenate(parts, axis=0)                  # (K*C_in, N)
        y = jnp.dot(w, xk, preferred_element_type=f32) + b   # (C_out, N)

        # LeakyReLU
        y = jnp.where(y >= 0, y, LRELU_SLOPE * y)

        # ---- LayerNorm(118) per (channel, batch segment): masked stats over
        # the 118 valid lanes of each 128-lane-aligned segment (exact f32).
        segs = []
        for bi in range(B_T):
            ys = y[:, bi * LP:(bi + 1) * LP]                 # 128-aligned slice
            mean = jnp.sum(ys * seg_validf, axis=1, keepdims=True) * inv_L
            diff = (ys - mean) * seg_validf
            var = jnp.sum(diff * diff, axis=1, keepdims=True) * inv_L
            segs.append((ys - mean) * jax.lax.rsqrt(var + LN_EPS))
        yn = jnp.concatenate(segs, axis=1) if B_T > 1 else segs[0]
        yn = yn * g + beta

        # ---- residual: identity path skips the 1x1 matmul entirely
        res = (jnp.dot(wd, h, preferred_element_type=f32) + bd) if has_down else h

        # ---- final ReLU; re-zero pad lanes so the next layer's roll trick
        # (and the final writeback) stay clean.
        h = jnp.where(valid, jnp.maximum(yn + res, 0.0), 0.0)

    o_ref[...] = h.astype(o_ref.dtype)


# -------------------------------- wrapper ------------------------------------
def temporal_conv_net(x, params, kernel_size=3, batch_tile=None):
    """x: (B, C_in, 118) -> (B, C_out_last, 118).  One fused pallas_call."""
    B, C0, L = x.shape
    if L != SEQ_LEN:
        raise ValueError(f"time length must be {SEQ_LEN} (LayerNorm(118))")
    LP = LANE_LEN

    # Batch tiling: one grid step handles the whole (small) batch by default;
    # for large B (or to split across v7x's two TensorCores) set batch_tile.
    if batch_tile is None:
        batch_tile = B if B <= 8 else 8
    if B % batch_tile != 0:
        batch_tile = B
    B_T = batch_tile
    n_tiles = B // B_T
    N = B_T * LP

    # Lane-dense input slab (C0, B*128): one 128-lane segment per batch
    # element, time in lanes [0,118), lanes [118,128) zero.  (Layout plumbing
    # only; the causal padding itself happens inside the kernel.)
    xp = jnp.pad(x, ((0, 0), (0, 0), (0, LP - L)))
    x_slab = jnp.transpose(xp, (1, 0, 2)).reshape(C0, B * LP)

    in_arrays = [x_slab]
    in_specs = [pl.BlockSpec((C0, N), lambda i: (0, i))]
    layer_cfg = []
    c_last = C0
    for li, pdict in enumerate(params):
        w = pdict["w"]                                       # (C_out, C_in, K)
        c_out, c_in, K = w.shape
        assert K == kernel_size and c_in == c_last
        dilation = 2 ** li                                   # as in the module

        # (C_out, K*C_in), columns grouped tap-major to match the kernel's
        # concatenation of the K shifted activation slabs.
        w_flat = jnp.transpose(w, (0, 2, 1)).reshape(c_out, K * c_in)
        g_slab = jnp.tile(jnp.pad(pdict["gamma"], (0, LP - L)), B_T)[None, :]
        b_slab = jnp.tile(jnp.pad(pdict["beta"], (0, LP - L)), B_T)[None, :]

        arrs = [w_flat, pdict["b"].reshape(c_out, 1), g_slab, b_slab]
        has_down = "wd" in pdict
        if has_down:
            arrs += [pdict["wd"], pdict["bd"].reshape(c_out, 1)]
        for a in arrs:
            in_arrays.append(a)
            in_specs.append(pl.BlockSpec(a.shape, lambda i: (0, 0)))
        layer_cfg.append((dilation, has_down))
        c_last = c_out

    kernel = functools.partial(
        _tcn_fused_kernel, layer_cfg=tuple(layer_cfg),
        K=kernel_size, L=L, LP=LP, B_T=B_T)

    out_slab = pl.pallas_call(
        kernel,
        out_shape=jax.ShapeDtypeStruct((c_last, B * LP), x.dtype),
        grid=(n_tiles,),
        in_specs=in_specs,
        out_specs=pl.BlockSpec((c_last, N), lambda i: (0, i)),
        compiler_params=pltpu.CompilerParams(
            dimension_semantics=("parallel",)),
    )(*in_arrays)

    out = out_slab.reshape(c_last, B, LP)[:, :, :L]
    return jnp.transpose(out, (1, 0, 2))


# --------------------------- parameter construction --------------------------
def init_tcn_params(key, num_inputs, num_channels, kernel_size=3):
    """Synthetic params matching the PyTorch module's shapes.

    weight_norm is a reparameterization that does not change the forward pass
    for fixed weights, so only the effective conv weight is materialized.
    The 1x1 downsample (wd, bd) exists only when C_in != C_out, exactly as in
    the module; otherwise the residual is the identity.
    """
    params = []
    c_in = num_inputs
    for c_out in num_channels:
        key, k1, k2, k3, k4, k5, k6 = jax.random.split(key, 7)
        fan_in, fan_out = c_in * kernel_size, c_out * kernel_size
        std = (2.0 / (fan_in + fan_out)) ** 0.5            # xavier_normal_
        p = dict(
            w=jax.random.normal(k1, (c_out, c_in, kernel_size), jnp.float32) * std,
            b=jax.random.normal(k2, (c_out,), jnp.float32) * 0.05,
            # LayerNorm affine params (perturbed from the 1/0 defaults so the
            # broadcast path is actually exercised by the test).
            gamma=1.0 + 0.1 * jax.random.normal(k5, (SEQ_LEN,), jnp.float32),
            beta=0.1 * jax.random.normal(k6, (SEQ_LEN,), jnp.float32),
        )
        if c_in != c_out:
            p["wd"] = jax.random.normal(k3, (c_out, c_in), jnp.float32) * (1.0 / c_in) ** 0.5
            p["bd"] = jax.random.normal(k4, (c_out,), jnp.float32) * 0.05
        params.append(p)
        c_in = c_out
    return params


# ------------------------------ pure-JAX reference ---------------------------
def _ref_block(x, p, kernel_size, dilation):
    pad = (kernel_size - 1) * dilation
    y = jax.lax.conv_general_dilated(
        x, p["w"], window_strides=(1,), padding=[(pad, pad)],
        rhs_dilation=(dilation,), dimension_numbers=("NCH", "OIH", "NCH"))
    y = y[:, :, :x.shape[2]] + p["b"][None, :, None]            # Chomp1d
    y = jnp.where(y >= 0, y, LRELU_SLOPE * y)                   # LeakyReLU
    mean = y.mean(-1, keepdims=True)
    var = ((y - mean) ** 2).mean(-1, keepdims=True)
    y = (y - mean) / jnp.sqrt(var + LN_EPS) * p["gamma"] + p["beta"]
    if "wd" in p:
        res = jnp.einsum("oc,bcl->bol", p["wd"], x) + p["bd"][None, :, None]
    else:
        res = x
    return jnp.maximum(y + res, 0.0)


def temporal_conv_net_ref(x, params, kernel_size=3):
    for li, p in enumerate(params):
        x = _ref_block(x, p, kernel_size, 2 ** li)
    return x


# ----------------------------------- main ------------------------------------
if __name__ == "__main__":
    key = jax.random.PRNGKey(0)
    kx, kp = jax.random.split(key)

    B, num_inputs = 2, 4
    num_channels = [8, 8]
    kernel_size = 3

    x = jax.random.normal(kx, (B, num_inputs, SEQ_LEN), jnp.float32)
    params = init_tcn_params(kp, num_inputs, num_channels, kernel_size)

    fwd = jax.jit(functools.partial(temporal_conv_net, kernel_size=kernel_size))
    out = jax.block_until_ready(fwd(x, params))
    assert out.shape == (B, num_channels[-1], SEQ_LEN)

    ref = temporal_conv_net_ref(x, params, kernel_size)
    np.testing.assert_allclose(np.asarray(out), np.asarray(ref),
                               rtol=1e-4, atol=1e-4)

    print("KERNEL_OK")
</pallas_src>

<mosaic_0001>
module attributes {stable_mosaic.version = 11 : i64} {
  func.func @_tcn_fused_kernel(%arg0: i32, %arg1: memref<4x256xf32, #tpu.memory_space<vmem>>, %arg2: memref<8x12xf32, #tpu.memory_space<vmem>>, %arg3: memref<8x1xf32, #tpu.memory_space<vmem>>, %arg4: memref<1x256xf32, #tpu.memory_space<vmem>>, %arg5: memref<1x256xf32, #tpu.memory_space<vmem>>, %arg6: memref<8x4xf32, #tpu.memory_space<vmem>>, %arg7: memref<8x1xf32, #tpu.memory_space<vmem>>, %arg8: memref<8x24xf32, #tpu.memory_space<vmem>>, %arg9: memref<8x1xf32, #tpu.memory_space<vmem>>, %arg10: memref<1x256xf32, #tpu.memory_space<vmem>>, %arg11: memref<1x256xf32, #tpu.memory_space<vmem>>, %arg12: memref<8x256xf32, #tpu.memory_space<vmem>>) attributes {dimension_semantics = [#tpu.dimension_semantics<parallel>], iteration_bounds = array<i64: 1>, scalar_prefetch = 0 : i64, scratch_operands = 0 : i64, tpu.core_type = #tpu.core_type<tc>, window_params = [{transform_indices = @transform_0, window_bounds = array<i64: 4, 256>}, {pipeline_mode = #tpu.pipeline_mode<synchronous>, transform_indices = @transform_1, window_bounds = array<i64: 8, 12>}, {pipeline_mode = #tpu.pipeline_mode<synchronous>, transform_indices = @transform_2, window_bounds = array<i64: 8, 1>}, {pipeline_mode = #tpu.pipeline_mode<synchronous>, transform_indices = @transform_3, window_bounds = array<i64: 1, 256>}, {pipeline_mode = #tpu.pipeline_mode<synchronous>, transform_indices = @transform_4, window_bounds = array<i64: 1, 256>}, {pipeline_mode = #tpu.pipeline_mode<synchronous>, transform_indices = @transform_5, window_bounds = array<i64: 8, 4>}, {pipeline_mode = #tpu.pipeline_mode<synchronous>, transform_indices = @transform_6, window_bounds = array<i64: 8, 1>}, {pipeline_mode = #tpu.pipeline_mode<synchronous>, transform_indices = @transform_7, window_bounds = array<i64: 8, 24>}, {pipeline_mode = #tpu.pipeline_mode<synchronous>, transform_indices = @transform_8, window_bounds = array<i64: 8, 1>}, {pipeline_mode = #tpu.pipeline_mode<synchronous>, transform_indices = @transform_9, window_bounds = array<i64: 1, 256>}, {pipeline_mode = #tpu.pipeline_mode<synchronous>, transform_indices = @transform_10, window_bounds = array<i64: 1, 256>}, {transform_indices = @transform_11, window_bounds = array<i64: 8, 256>}]} {
    %0 = tpu.iota {dimensions = array<i32: 1>} : vector<1x256xi32>
    %c127_i32 = arith.constant 127 : i32
    %1 = vector.broadcast %c127_i32 : i32 to vector<1x256xi32>
    %2 = arith.andi %0, %1 : vector<1x256xi32>
    %c118_i32 = arith.constant 118 : i32
    %3 = vector.broadcast %c118_i32 : i32 to vector<1x256xi32>
    %4 = arith.cmpi slt, %2, %3 : vector<1x256xi32>
    %5 = tpu.iota {dimensions = array<i32: 1>} : vector<1x128xi32>
    %c118_i32_0 = arith.constant 118 : i32
    %6 = vector.broadcast %c118_i32_0 : i32 to vector<1x128xi32>
    %7 = arith.cmpi slt, %5, %6 : vector<1x128xi32>
    %8 = arith.extui %7 : vector<1x128xi1> to vector<1x128xi32>
    %9 = arith.sitofp %8 : vector<1x128xi32> to vector<1x128xf32>
    %c0 = arith.constant 0 : index
    %c0_1 = arith.constant 0 : index
    %10 = vector.load %arg1[%c0, %c0_1] : memref<4x256xf32, #tpu.memory_space<vmem>>, vector<4x256xf32>
    %c0_2 = arith.constant 0 : index
    %c0_3 = arith.constant 0 : index
    %11 = vector.load %arg2[%c0_2, %c0_3] : memref<8x12xf32, #tpu.memory_space<vmem>>, vector<8x12xf32>
    %c0_4 = arith.constant 0 : index
    %c0_5 = arith.constant 0 : index
    %12 = vector.load %arg3[%c0_4, %c0_5] : memref<8x1xf32, #tpu.memory_space<vmem>>, vector<8x1xf32>
    %c0_6 = arith.constant 0 : index
    %c0_7 = arith.constant 0 : index
    %13 = vector.load %arg4[%c0_6, %c0_7] : memref<1x256xf32, #tpu.memory_space<vmem>>, vector<1x256xf32>
    %c0_8 = arith.constant 0 : index
    %c0_9 = arith.constant 0 : index
    %14 = vector.load %arg5[%c0_8, %c0_9] : memref<1x256xf32, #tpu.memory_space<vmem>>, vector<1x256xf32>
    %c0_10 = arith.constant 0 : index
    %c0_11 = arith.constant 0 : index
    %15 = vector.load %arg6[%c0_10, %c0_11] : memref<8x4xf32, #tpu.memory_space<vmem>>, vector<8x4xf32>
    %c0_12 = arith.constant 0 : index
    %c0_13 = arith.constant 0 : index
    %16 = vector.load %arg7[%c0_12, %c0_13] : memref<8x1xf32, #tpu.memory_space<vmem>>, vector<8x1xf32>
    %c2_i32 = arith.constant 2 : i32
    %17 = tpu.dynamic_rotate %10 by %c2_i32 dim 1 : vector<4x256xf32>, i32 -> vector<4x256xf32>
    %c2_i32_14 = arith.constant 2 : i32
    %18 = vector.broadcast %c2_i32_14 : i32 to vector<1x256xi32>
    %19 = arith.cmpi sge, %2, %18 : vector<1x256xi32>
    %cst = arith.constant 0.000000e+00 : f32
    %20 = vector.shape_cast %19 : vector<1x256xi1> to vector<1x256xi1>
    %21 = vector.broadcast %20 : vector<1x256xi1> to vector<4x256xi1>
    %22 = vector.broadcast %cst : f32 to vector<4x256xf32>
    %23 = arith.select %21, %17, %22 : vector<4x256xi1>, vector<4x256xf32>
    %c1_i32 = arith.constant 1 : i32
    %24 = tpu.dynamic_rotate %10 by %c1_i32 dim 1 : vector<4x256xf32>, i32 -> vector<4x256xf32>
    %c1_i32_15 = arith.constant 1 : i32
    %25 = vector.broadcast %c1_i32_15 : i32 to vector<1x256xi32>
    %26 = arith.cmpi sge, %2, %25 : vector<1x256xi32>
    %cst_16 = arith.constant 0.000000e+00 : f32
    %27 = vector.shape_cast %26 : vector<1x256xi1> to vector<1x256xi1>
    %28 = vector.broadcast %27 : vector<1x256xi1> to vector<4x256xi1>
    %29 = vector.broadcast %cst_16 : f32 to vector<4x256xf32>
    %30 = arith.select %28, %24, %29 : vector<4x256xi1>, vector<4x256xf32>
    %31 = tpu.concatenate %23, %30, %10 in 0 : vector<4x256xf32>, vector<4x256xf32>, vector<4x256xf32> -> vector<12x256xf32>
    %cst_17 = arith.constant dense<0.000000e+00> : vector<8x256xf32>
    %32 = tpu.matmul %11, %31, %cst_17 {dimension_numbers = #tpu.dot_dimension_numbers<[1], [0], [0], [1], [0, 0, 1, 1], [], []>} : vector<8x12xf32>, vector<12x256xf32>, vector<8x256xf32> -> vector<8x256xf32>
    %33 = vector.broadcast %12 : vector<8x1xf32> to vector<8x256xf32>
    %34 = arith.addf %32, %33 : vector<8x256xf32>
    %cst_18 = arith.constant 0.000000e+00 : f32
    %35 = vector.broadcast %cst_18 : f32 to vector<8x256xf32>
    %36 = arith.cmpf oge, %34, %35 : vector<8x256xf32>
    %cst_19 = arith.constant 0.00999999977 : f32
    %37 = vector.broadcast %cst_19 : f32 to vector<8x256xf32>
    %38 = arith.mulf %37, %34 : vector<8x256xf32>
    %39 = arith.select %36, %34, %38 : vector<8x256xi1>, vector<8x256xf32>
    %40 = vector.extract_strided_slice %39 {offsets = [0, 0], sizes = [8, 128], strides = [1, 1]} : vector<8x256xf32> to vector<8x128xf32>
    %41 = vector.broadcast %9 : vector<1x128xf32> to vector<8x128xf32>
    %42 = arith.mulf %40, %41 : vector<8x128xf32>
    %cst_20 = arith.constant dense<0.000000e+00> : vector<8xf32>
    %43 = vector.multi_reduction <add>, %42, %cst_20 [1] : vector<8x128xf32> to vector<8xf32>
    %44 = vector.shape_cast %43 : vector<8xf32> to vector<8x1xf32>
    %cst_21 = arith.constant 0.00847457629 : f32
    %45 = vector.broadcast %cst_21 : f32 to vector<8x1xf32>
    %46 = arith.mulf %44, %45 : vector<8x1xf32>
    %47 = vector.broadcast %46 : vector<8x1xf32> to vector<8x128xf32>
    %48 = arith.subf %40, %47 : vector<8x128xf32>
    %49 = vector.broadcast %9 : vector<1x128xf32> to vector<8x128xf32>
    %50 = arith.mulf %48, %49 : vector<8x128xf32>
    %51 = arith.mulf %50, %50 : vector<8x128xf32>
    %cst_22 = arith.constant dense<0.000000e+00> : vector<8xf32>
    %52 = vector.multi_reduction <add>, %51, %cst_22 [1] : vector<8x128xf32> to vector<8xf32>
    %53 = vector.shape_cast %52 : vector<8xf32> to vector<8x1xf32>
    %cst_23 = arith.constant 0.00847457629 : f32
    %54 = vector.broadcast %cst_23 : f32 to vector<8x1xf32>
    %55 = arith.mulf %53, %54 : vector<8x1xf32>
    %56 = vector.broadcast %46 : vector<8x1xf32> to vector<8x128xf32>
    %57 = arith.subf %40, %56 : vector<8x128xf32>
    %cst_24 = arith.constant 9.99999974E-6 : f32
    %58 = vector.broadcast %cst_24 : f32 to vector<8x1xf32>
    %59 = arith.addf %55, %58 : vector<8x1xf32>
    %60 = math.rsqrt %59 : vector<8x1xf32>
    %61 = vector.broadcast %60 : vector<8x1xf32> to vector<8x128xf32>
    %62 = arith.mulf %57, %61 : vector<8x128xf32>
    %63 = vector.extract_strided_slice %39 {offsets = [0, 128], sizes = [8, 128], strides = [1, 1]} : vector<8x256xf32> to vector<8x128xf32>
    %64 = vector.broadcast %9 : vector<1x128xf32> to vector<8x128xf32>
    %65 = arith.mulf %63, %64 : vector<8x128xf32>
    %cst_25 = arith.constant dense<0.000000e+00> : vector<8xf32>
    %66 = vector.multi_reduction <add>, %65, %cst_25 [1] : vector<8x128xf32> to vector<8xf32>
    %67 = vector.shape_cast %66 : vector<8xf32> to vector<8x1xf32>
    %cst_26 = arith.constant 0.00847457629 : f32
    %68 = vector.broadcast %cst_26 : f32 to vector<8x1xf32>
    %69 = arith.mulf %67, %68 : vector<8x1xf32>
    %70 = vector.broadcast %69 : vector<8x1xf32> to vector<8x128xf32>
    %71 = arith.subf %63, %70 : vector<8x128xf32>
    %72 = vector.broadcast %9 : vector<1x128xf32> to vector<8x128xf32>
    %73 = arith.mulf %71, %72 : vector<8x128xf32>
    %74 = arith.mulf %73, %73 : vector<8x128xf32>
    %cst_27 = arith.constant dense<0.000000e+00> : vector<8xf32>
    %75 = vector.multi_reduction <add>, %74, %cst_27 [1] : vector<8x128xf32> to vector<8xf32>
    %76 = vector.shape_cast %75 : vector<8xf32> to vector<8x1xf32>
    %cst_28 = arith.constant 0.00847457629 : f32
    %77 = vector.broadcast %cst_28 : f32 to vector<8x1xf32>
    %78 = arith.mulf %76, %77 : vector<8x1xf32>
    %79 = vector.broadcast %69 : vector<8x1xf32> to vector<8x128xf32>
    %80 = arith.subf %63, %79 : vector<8x128xf32>
    %cst_29 = arith.constant 9.99999974E-6 : f32
    %81 = vector.broadcast %cst_29 : f32 to vector<8x1xf32>
    %82 = arith.addf %78, %81 : vector<8x1xf32>
    %83 = math.rsqrt %82 : vector<8x1xf32>
    %84 = vector.broadcast %83 : vector<8x1xf32> to vector<8x128xf32>
    %85 = arith.mulf %80, %84 : vector<8x128xf32>
    %86 = tpu.concatenate %62, %85 in 1 : vector<8x128xf32>, vector<8x128xf32> -> vector<8x256xf32>
    %87 = vector.broadcast %13 : vector<1x256xf32> to vector<8x256xf32>
    %88 = arith.mulf %86, %87 : vector<8x256xf32>
    %89 = vector.broadcast %14 : vector<1x256xf32> to vector<8x256xf32>
    %90 = arith.addf %88, %89 : vector<8x256xf32>
    %cst_30 = arith.constant dense<0.000000e+00> : vector<8x256xf32>
    %91 = tpu.matmul %15, %10, %cst_30 {dimension_numbers = #tpu.dot_dimension_numbers<[1], [0], [0], [1], [0, 0, 1, 1], [], []>} : vector<8x4xf32>, vector<4x256xf32>, vector<8x256xf32> -> vector<8x256xf32>
    %92 = vector.broadcast %16 : vector<8x1xf32> to vector<8x256xf32>
    %93 = arith.addf %91, %92 : vector<8x256xf32>
    %94 = arith.addf %90, %93 : vector<8x256xf32>
    %cst_31 = arith.constant 0.000000e+00 : f32
    %95 = vector.broadcast %cst_31 : f32 to vector<8x256xf32>
    %96 = arith.maximumf %94, %95 : vector<8x256xf32>
    %cst_32 = arith.constant 0.000000e+00 : f32
    %97 = vector.shape_cast %4 : vector<1x256xi1> to vector<1x256xi1>
    %98 = vector.broadcast %97 : vector<1x256xi1> to vector<8x256xi1>
    %99 = vector.broadcast %cst_32 : f32 to vector<8x256xf32>
    %100 = arith.select %98, %96, %99 : vector<8x256xi1>, vector<8x256xf32>
    %c0_33 = arith.constant 0 : index
    %c0_34 = arith.constant 0 : index
    %101 = vector.load %arg8[%c0_33, %c0_34] : memref<8x24xf32, #tpu.memory_space<vmem>>, vector<8x24xf32>
    %c0_35 = arith.constant 0 : index
    %c0_36 = arith.constant 0 : index
    %102 = vector.load %arg9[%c0_35, %c0_36] : memref<8x1xf32, #tpu.memory_space<vmem>>, vector<8x1xf32>
    %c0_37 = arith.constant 0 : index
    %c0_38 = arith.constant 0 : index
    %103 = vector.load %arg10[%c0_37, %c0_38] : memref<1x256xf32, #tpu.memory_space<vmem>>, vector<1x256xf32>
    %c0_39 = arith.constant 0 : index
    %c0_40 = arith.constant 0 : index
    %104 = vector.load %arg11[%c0_39, %c0_40] : memref<1x256xf32, #tpu.memory_space<vmem>>, vector<1x256xf32>
    %c4_i32 = arith.constant 4 : i32
    %105 = tpu.dynamic_rotate %100 by %c4_i32 dim 1 : vector<8x256xf32>, i32 -> vector<8x256xf32>
    %c4_i32_41 = arith.constant 4 : i32
    %106 = vector.broadcast %c4_i32_41 : i32 to vector<1x256xi32>
    %107 = arith.cmpi sge, %2, %106 : vector<1x256xi32>
    %cst_42 = arith.constant 0.000000e+00 : f32
    %108 = vector.shape_cast %107 : vector<1x256xi1> to vector<1x256xi1>
    %109 = vector.broadcast %108 : vector<1x256xi1> to vector<8x256xi1>
    %110 = vector.broadcast %cst_42 : f32 to vector<8x256xf32>
    %111 = arith.select %109, %105, %110 : vector<8x256xi1>, vector<8x256xf32>
    %c2_i32_43 = arith.constant 2 : i32
    %112 = tpu.dynamic_rotate %100 by %c2_i32_43 dim 1 : vector<8x256xf32>, i32 -> vector<8x256xf32>
    %c2_i32_44 = arith.constant 2 : i32
    %113 = vector.broadcast %c2_i32_44 : i32 to vector<1x256xi32>
    %114 = arith.cmpi sge, %2, %113 : vector<1x256xi32>
    %cst_45 = arith.constant 0.000000e+00 : f32
    %115 = vector.shape_cast %114 : vector<1x256xi1> to vector<1x256xi1>
    %116 = vector.broadcast %115 : vector<1x256xi1> to vector<8x256xi1>
    %117 = vector.broadcast %cst_45 : f32 to vector<8x256xf32>
    %118 = arith.select %116, %112, %117 : vector<8x256xi1>, vector<8x256xf32>
    %119 = tpu.concatenate %111, %118, %100 in 0 : vector<8x256xf32>, vector<8x256xf32>, vector<8x256xf32> -> vector<24x256xf32>
    %cst_46 = arith.constant dense<0.000000e+00> : vector<8x256xf32>
    %120 = tpu.matmul %101, %119, %cst_46 {dimension_numbers = #tpu.dot_dimension_numbers<[1], [0], [0], [1], [0, 0, 1, 1], [], []>} : vector<8x24xf32>, vector<24x256xf32>, vector<8x256xf32> -> vector<8x256xf32>
    %121 = vector.broadcast %102 : vector<8x1xf32> to vector<8x256xf32>
    %122 = arith.addf %120, %121 : vector<8x256xf32>
    %cst_47 = arith.constant 0.000000e+00 : f32
    %123 = vector.broadcast %cst_47 : f32 to vector<8x256xf32>
    %124 = arith.cmpf oge, %122, %123 : vector<8x256xf32>
    %cst_48 = arith.constant 0.00999999977 : f32
    %125 = vector.broadcast %cst_48 : f32 to vector<8x256xf32>
    %126 = arith.mulf %125, %122 : vector<8x256xf32>
    %127 = arith.select %124, %122, %126 : vector<8x256xi1>, vector<8x256xf32>
    %128 = vector.extract_strided_slice %127 {offsets = [0, 0], sizes = [8, 128], strides = [1, 1]} : vector<8x256xf32> to vector<8x128xf32>
    %129 = vector.broadcast %9 : vector<1x128xf32> to vector<8x128xf32>
    %130 = arith.mulf %128, %129 : vector<8x128xf32>
    %cst_49 = arith.constant dense<0.000000e+00> : vector<8xf32>
    %131 = vector.multi_reduction <add>, %130, %cst_49 [1] : vector<8x128xf32> to vector<8xf32>
    %132 = vector.shape_cast %131 : vector<8xf32> to vector<8x1xf32>
    %cst_50 = arith.constant 0.00847457629 : f32
    %133 = vector.broadcast %cst_50 : f32 to vector<8x1xf32>
    %134 = arith.mulf %132, %133 : vector<8x1xf32>
    %135 = vector.broadcast %134 : vector<8x1xf32> to vector<8x128xf32>
    %136 = arith.subf %128, %135 : vector<8x128xf32>
    %137 = vector.broadcast %9 : vector<1x128xf32> to vector<8x128xf32>
    %138 = arith.mulf %136, %137 : vector<8x128xf32>
    %139 = arith.mulf %138, %138 : vector<8x128xf32>
    %cst_51 = arith.constant dense<0.000000e+00> : vector<8xf32>
    %140 = vector.multi_reduction <add>, %139, %cst_51 [1] : vector<8x128xf32> to vector<8xf32>
    %141 = vector.shape_cast %140 : vector<8xf32> to vector<8x1xf32>
    %cst_52 = arith.constant 0.00847457629 : f32
    %142 = vector.broadcast %cst_52 : f32 to vector<8x1xf32>
    %143 = arith.mulf %141, %142 : vector<8x1xf32>
    %144 = vector.broadcast %134 : vector<8x1xf32> to vector<8x128xf32>
    %145 = arith.subf %128, %144 : vector<8x128xf32>
    %cst_53 = arith.constant 9.99999974E-6 : f32
    %146 = vector.broadcast %cst_53 : f32 to vector<8x1xf32>
    %147 = arith.addf %143, %146 : vector<8x1xf32>
    %148 = math.rsqrt %147 : vector<8x1xf32>
    %149 = vector.broadcast %148 : vector<8x1xf32> to vector<8x128xf32>
    %150 = arith.mulf %145, %149 : vector<8x128xf32>
    %151 = vector.extract_strided_slice %127 {offsets = [0, 128], sizes = [8, 128], strides = [1, 1]} : vector<8x256xf32> to vector<8x128xf32>
    %152 = vector.broadcast %9 : vector<1x128xf32> to vector<8x128xf32>
    %153 = arith.mulf %151, %152 : vector<8x128xf32>
    %cst_54 = arith.constant dense<0.000000e+00> : vector<8xf32>
    %154 = vector.multi_reduction <add>, %153, %cst_54 [1] : vector<8x128xf32> to vector<8xf32>
    %155 = vector.shape_cast %154 : vector<8xf32> to vector<8x1xf32>
    %cst_55 = arith.constant 0.00847457629 : f32
    %156 = vector.broadcast %cst_55 : f32 to vector<8x1xf32>
    %157 = arith.mulf %155, %156 : vector<8x1xf32>
    %158 = vector.broadcast %157 : vector<8x1xf32> to vector<8x128xf32>
    %159 = arith.subf %151, %158 : vector<8x128xf32>
    %160 = vector.broadcast %9 : vector<1x128xf32> to vector<8x128xf32>
    %161 = arith.mulf %159, %160 : vector<8x128xf32>
    %162 = arith.mulf %161, %161 : vector<8x128xf32>
    %cst_56 = arith.constant dense<0.000000e+00> : vector<8xf32>
    %163 = vector.multi_reduction <add>, %162, %cst_56 [1] : vector<8x128xf32> to vector<8xf32>
    %164 = vector.shape_cast %163 : vector<8xf32> to vector<8x1xf32>
    %cst_57 = arith.constant 0.00847457629 : f32
    %165 = vector.broadcast %cst_57 : f32 to vector<8x1xf32>
    %166 = arith.mulf %164, %165 : vector<8x1xf32>
    %167 = vector.broadcast %157 : vector<8x1xf32> to vector<8x128xf32>
    %168 = arith.subf %151, %167 : vector<8x128xf32>
    %cst_58 = arith.constant 9.99999974E-6 : f32
    %169 = vector.broadcast %cst_58 : f32 to vector<8x1xf32>
    %170 = arith.addf %166, %169 : vector<8x1xf32>
    %171 = math.rsqrt %170 : vector<8x1xf32>
    %172 = vector.broadcast %171 : vector<8x1xf32> to vector<8x128xf32>
    %173 = arith.mulf %168, %172 : vector<8x128xf32>
    %174 = tpu.concatenate %150, %173 in 1 : vector<8x128xf32>, vector<8x128xf32> -> vector<8x256xf32>
    %175 = vector.broadcast %103 : vector<1x256xf32> to vector<8x256xf32>
    %176 = arith.mulf %174, %175 : vector<8x256xf32>
    %177 = vector.broadcast %104 : vector<1x256xf32> to vector<8x256xf32>
    %178 = arith.addf %176, %177 : vector<8x256xf32>
    %179 = arith.addf %178, %100 : vector<8x256xf32>
    %cst_59 = arith.constant 0.000000e+00 : f32
    %180 = vector.broadcast %cst_59 : f32 to vector<8x256xf32>
    %181 = arith.maximumf %179, %180 : vector<8x256xf32>
    %cst_60 = arith.constant 0.000000e+00 : f32
    %182 = vector.shape_cast %4 : vector<1x256xi1> to vector<1x256xi1>
    %183 = vector.broadcast %182 : vector<1x256xi1> to vector<8x256xi1>
    %184 = vector.broadcast %cst_60 : f32 to vector<8x256xf32>
    %185 = arith.select %183, %181, %184 : vector<8x256xi1>, vector<8x256xf32>
    %c0_61 = arith.constant 0 : index
    %c0_62 = arith.constant 0 : index
    %186 = vector.load %arg12[%c0_61, %c0_62] : memref<8x256xf32, #tpu.memory_space<vmem>>, vector<8x256xf32>
    tpu.vector_store %arg12[%c0_61, %c0_62], %185 {strides = array<i32>} : memref<8x256xf32, #tpu.memory_space<vmem>>, vector<8x256xf32>,
    return
  }
  func.func @transform_0(%arg0: i32) -> (i32, i32) {
    %c0_i32 = arith.constant 0 : i32
    %c0_i32_0 = arith.constant 0 : i32
    return %c0_i32, %arg0 : i32, i32
  }
  func.func @transform_1(%arg0: i32) -> (i32, i32) {
    %c0_i32 = arith.constant 0 : i32
    %c0_i32_0 = arith.constant 0 : i32
    %c0_i32_1 = arith.constant 0 : i32
    return %c0_i32, %c0_i32_0 : i32, i32
  }
  func.func @transform_2(%arg0: i32) -> (i32, i32) {
    %c0_i32 = arith.constant 0 : i32
    %c0_i32_0 = arith.constant 0 : i32
    %c0_i32_1 = arith.constant 0 : i32
    return %c0_i32, %c0_i32_0 : i32, i32
  }
  func.func @transform_3(%arg0: i32) -> (i32, i32) {
    %c0_i32 = arith.constant 0 : i32
    %c0_i32_0 = arith.constant 0 : i32
    %c0_i32_1 = arith.constant 0 : i32
    return %c0_i32, %c0_i32_0 : i32, i32
  }
  func.func @transform_4(%arg0: i32) -> (i32, i32) {
    %c0_i32 = arith.constant 0 : i32
    %c0_i32_0 = arith.constant 0 : i32
    %c0_i32_1 = arith.constant 0 : i32
    return %c0_i32, %c0_i32_0 : i32, i32
  }
  func.func @transform_5(%arg0: i32) -> (i32, i32) {
    %c0_i32 = arith.constant 0 : i32
    %c0_i32_0 = arith.constant 0 : i32
    %c0_i32_1 = arith.constant 0 : i32
    return %c0_i32, %c0_i32_0 : i32, i32
  }
  func.func @transform_6(%arg0: i32) -> (i32, i32) {
    %c0_i32 = arith.constant 0 : i32
    %c0_i32_0 = arith.constant 0 : i32
    %c0_i32_1 = arith.constant 0 : i32
    return %c0_i32, %c0_i32_0 : i32, i32
  }
  func.func @transform_7(%arg0: i32) -> (i32, i32) {
    %c0_i32 = arith.constant 0 : i32
    %c0_i32_0 = arith.constant 0 : i32
    %c0_i32_1 = arith.constant 0 : i32
    return %c0_i32, %c0_i32_0 : i32, i32
  }
  func.func @transform_8(%arg0: i32) -> (i32, i32) {
    %c0_i32 = arith.constant 0 : i32
    %c0_i32_0 = arith.constant 0 : i32
    %c0_i32_1 = arith.constant 0 : i32
    return %c0_i32, %c0_i32_0 : i32, i32
  }
  func.func @transform_9(%arg0: i32) -> (i32, i32) {
    %c0_i32 = arith.constant 0 : i32
    %c0_i32_0 = arith.constant 0 : i32
    %c0_i32_1 = arith.constant 0 : i32
    return %c0_i32, %c0_i32_0 : i32, i32
  }
  func.func @transform_10(%arg0: i32) -> (i32, i32) {
    %c0_i32 = arith.constant 0 : i32
    %c0_i32_0 = arith.constant 0 : i32
    %c0_i32_1 = arith.constant 0 : i32
    return %c0_i32, %c0_i32_0 : i32, i32
  }
  func.func @transform_11(%arg0: i32) -> (i32, i32) {
    %c0_i32 = arith.constant 0 : i32
    %c0_i32_0 = arith.constant 0 : i32
    return %c0_i32, %arg0 : i32, i32
  }
}

</mosaic_0001>

<llo_original>
// kernel: tile.38
$region0: #{tile.38}
  #allocation0 [shape = 's32[1]{0}', space=sflag, size = 0x4, scoped, tag = 'scoped memory for tile.38']
  %s0 = inlined_call_operand.vmem [shape: f32[128], index: 0, kind: input, shape index: {}]
  %s1 = inlined_call_operand.vmem [shape: f32[2,128], index: 1, kind: output, shape index: {}]
  // Predicated region
  $region2: #{tile.38} parent=0 // pred_check
    _
  $region3: #{tile.38} parent=0 // pred_check_branch
    %3 = sbr.rel (0) target = $region5
  $region4: #{tile.38} parent=0 // pred_region
    _
  $region5: #{tile.38} parent=0 // pred_fallthru
    _
  %v4 = vld [vmem:[%s0] ss:$0 sm:$0xff]
  %5 = vst [vmem:[%s1] sm:$0x3] %v4

// kernel: temporal_conv_net.1
$region0: #{temporal_conv_net.1}
  #allocation0 [shape = 'u32[]', space=smem, size = 0x4, offset = 0x4, fixed_abs, tag = 'smem constant byte address 0x4 - core index']
  #allocation1 [shape = 'u32[72,128]{1,0:T(1,128)}', space=vmem, size = 0x9000, scoped, tag = 'internal scratch']
  %s0 = inlined_call_operand.vmem [shape: f32[4,256], index: 0, kind: input, shape index: {}]
  %s1 = inlined_call_operand.vmem [shape: f32[8,12], index: 1, kind: input, shape index: {}]
  %s2 = inlined_call_operand.vmem [shape: f32[8,1], index: 2, kind: input, shape index: {}]
  %s3 = inlined_call_operand.vmem [shape: f32[1,256], index: 3, kind: input, shape index: {}]
  %s4 = inlined_call_operand.vmem [shape: f32[1,256], index: 4, kind: input, shape index: {}]
  %s5 = inlined_call_operand.vmem [shape: f32[8,4], index: 5, kind: input, shape index: {}]
  %s6 = inlined_call_operand.vmem [shape: f32[8,1], index: 6, kind: input, shape index: {}]
  %s7 = inlined_call_operand.vmem [shape: f32[8,24], index: 7, kind: input, shape index: {}]
  %s8 = inlined_call_operand.vmem [shape: f32[8,1], index: 8, kind: input, shape index: {}]
  %s9 = inlined_call_operand.vmem [shape: f32[1,256], index: 9, kind: input, shape index: {}]
  %s10 = inlined_call_operand.vmem [shape: f32[1,256], index: 10, kind: input, shape index: {}]
  %s11 = inlined_call_operand.vmem [shape: f32[8,256], index: 11, kind: output, shape index: {}]
  %s12 = sld [smem:[#allocation0]]
  $region54: #{temporal_conv_net.1} parent=0
    _
  %s14 = ssub.s32 1, %s12
  %s15 = scalar_select 0, %s14, %s12
  // Predicated region
  $region2: #{temporal_conv_net.1} parent=0 // pred_check
    _
  $region3: #{temporal_conv_net.1} parent=0 // pred_check_branch
    %17 = sbr.rel (0) target = $region5
  $region4: #{temporal_conv_net.1} parent=0 // pred_region
    _
  $region5: #{temporal_conv_net.1} parent=0 // pred_fallthru
    _
  // Predicated region
  $region6: #{temporal_conv_net.1} parent=0 // pred_check
    _
  $region7: #{temporal_conv_net.1} parent=0 // pred_check_branch
    %19 = sbr.rel (0) target = $region9
  $region8: #{temporal_conv_net.1} parent=0 // pred_region
    _
  $region9: #{temporal_conv_net.1} parent=0 // pred_fallthru
    _
  // Predicated region
  $region10: #{temporal_conv_net.1} parent=0 // pred_check
    _
  $region11: #{temporal_conv_net.1} parent=0 // pred_check_branch
    %21 = sbr.rel (0) target = $region13
  $region12: #{temporal_conv_net.1} parent=0 // pred_region
    _
  $region13: #{temporal_conv_net.1} parent=0 // pred_fallthru
    _
  // Predicated region
  $region14: #{temporal_conv_net.1} parent=0 // pred_check
    _
  $region15: #{temporal_conv_net.1} parent=0 // pred_check_branch
    %23 = sbr.rel (0) target = $region17
  $region16: #{temporal_conv_net.1} parent=0 // pred_region
    _
  $region17: #{temporal_conv_net.1} parent=0 // pred_fallthru
    _
  // Predicated region
  $region18: #{temporal_conv_net.1} parent=0 // pred_check
    _
  $region19: #{temporal_conv_net.1} parent=0 // pred_check_branch
    %25 = sbr.rel (0) target = $region21
  $region20: #{temporal_conv_net.1} parent=0 // pred_region
    _
  $region21: #{temporal_conv_net.1} parent=0 // pred_fallthru
    _
  // Predicated region
  $region22: #{temporal_conv_net.1} parent=0 // pred_check
    _
  $region23: #{temporal_conv_net.1} parent=0 // pred_check_branch
    %27 = sbr.rel (0) target = $region25
  $region24: #{temporal_conv_net.1} parent=0 // pred_region
    _
  $region25: #{temporal_conv_net.1} parent=0 // pred_fallthru
    _
  // Predicated region
  $region26: #{temporal_conv_net.1} parent=0 // pred_check
    _
  $region27: #{temporal_conv_net.1} parent=0 // pred_check_branch
    %29 = sbr.rel (0) target = $region29
  $region28: #{temporal_conv_net.1} parent=0 // pred_region
    _
  $region29: #{temporal_conv_net.1} parent=0 // pred_fallthru
    _
  // Predicated region
  $region30: #{temporal_conv_net.1} parent=0 // pred_check
    _
  $region31: #{temporal_conv_net.1} parent=0 // pred_check_branch
    %31 = sbr.rel (0) target = $region33
  $region32: #{temporal_conv_net.1} parent=0 // pred_region
    _
  $region33: #{temporal_conv_net.1} parent=0 // pred_fallthru
    _
  // Predicated region
  $region34: #{temporal_conv_net.1} parent=0 // pred_check
    _
  $region35: #{temporal_conv_net.1} parent=0 // pred_check_branch
    %33 = sbr.rel (0) target = $region37
  $region36: #{temporal_conv_net.1} parent=0 // pred_region
    _
  $region37: #{temporal_conv_net.1} parent=0 // pred_fallthru
    _
  // Predicated region
  $region38: #{temporal_conv_net.1} parent=0 // pred_check
    _
  $region39: #{temporal_conv_net.1} parent=0 // pred_check_branch
    %35 = sbr.rel (0) target = $region41
  $region40: #{temporal_conv_net.1} parent=0 // pred_region
    _
  $region41: #{temporal_conv_net.1} parent=0 // pred_fallthru
    _
  // Predicated region
  $region42: #{temporal_conv_net.1} parent=0 // pred_check
    _
  $region43: #{temporal_conv_net.1} parent=0 // pred_check_branch
    %37 = sbr.rel (0) target = $region45
  $region44: #{temporal_conv_net.1} parent=0 // pred_region
    _
  $region45: #{temporal_conv_net.1} parent=0 // pred_fallthru
    _
  %v38 = vlaneseq
  %v39 = vand.u32 %v38, 127
  %v40 = vadd.s32 %v39, 128
  %v41 = vand.u32 %v39, 127
  %v42 = vand.u32 %v40, 127
  %vm43 = vcmp.lt.s32.totalorder %v41, 118
  %vm44 = vcmp.lt.s32.totalorder %v42, 118
  %vm45 = vcmp.lt.s32.totalorder %v39, 118
  %v46 = vsel %vm45, 1, 0
  %v47 = vcvt.s32.f32 %v46
  %v48 = vld [vmem:[%s0] sm:$0xff]
  %v49 = vld [vmem:[%s1] sm:$0xff]
  %v50 = vld [vmem:[%s2] sm:$0xff]
  %v51 = vld [vmem:[%s3] sm:$0x3]
  %v52 = vld [vmem:[%s4] sm:$0x3]
  %v53 = vld [vmem:[%s5] sm:$0xff]
  %v54 = vld [vmem:[%s6] sm:$0xff]
  %56 = vst [vmem:[#allocation1] ss:$2 sm:$0xff] %v48
  %v57 = vld.sshfl [vmem:[#allocation1] sm:$0xff pattern:$0x75316420]
  %v58 = vld.sshfl [vmem:[#allocation1 + $0x8] sm:$0xff pattern:$0x75316420]
  %61 = vrot.lane.b32.xlu0 %v57, 2
  %v62 = vpop.permute.xlu0 %61
  %63 = vrot.lane.b32.xlu0 %v58, 2
  %v64 = vpop.permute.xlu0 %63
  %vm65 = vcmp.lt.s32.totalorder %v39, 2
  %v66 = vsel %vm65, %v62, %v64
  %v67 = vsel %vm65, %v64, %v62
  %vm68 = vcmp.ge.s32.totalorder %v41, 2
  %vm69 = vcmp.ge.s32.totalorder %v42, 2
  %v70 = vsel %vm68, 1, 0
  %v71 = vsel %vm69, 1, 0
  %vm72 = vcmp.eq.s32.totalorder %v70, 1
  %vm73 = vcmp.eq.s32.totalorder %v71, 1
  %v74 = vsel %vm72, %v67, 0.0
  %v75 = vsel %vm73, %v66, 0.0
  %76 = vst [vmem:[#allocation1] ss:$2 sm:$0xff] %v48
  %v77 = vld.sshfl [vmem:[#allocation1] sm:$0xff pattern:$0x75316420]
  %v78 = vld.sshfl [vmem:[#allocation1 + $0x8] sm:$0xff pattern:$0x75316420]
  %81 = vrot.lane.b32.xlu0 %v77, 1
  %v82 = vpop.permute.xlu0 %81
  %83 = vrot.lane.b32.xlu0 %v78, 1
  %v84 = vpop.permute.xlu0 %83
  %vm85 = vcmp.lt.s32.totalorder %v39, 1
  %v86 = vsel %vm85, %v82, %v84
  %v87 = vsel %vm85, %v84, %v82
  %vm88 = vcmp.ge.s32.totalorder %v41, 1
  %vm89 = vcmp.ge.s32.totalorder %v42, 1
  %v90 = vsel %vm88, 1, 0
  %v91 = vsel %vm89, 1, 0
  %vm92 = vcmp.eq.s32.totalorder %v90, 1
  %vm93 = vcmp.eq.s32.totalorder %v91, 1
  %v94 = vsel %vm92, %v87, 0.0
  %v95 = vsel %vm93, %v86, 0.0
  %v98 = vrot.slane %v94, 4
  %v99 = vrot.slane %v95, 4
  %102 = vst [vmem:[#allocation1] ss:$2 sm:$0xff] %v48
  %v103 = vld.sshfl [vmem:[#allocation1] sm:$0xff pattern:$0x75316420]
  %v104 = vld.sshfl [vmem:[#allocation1 + $0x8] sm:$0xff pattern:$0x75316420]
  %vm105 = vcmask 1043456
  %v106 = vsel %vm105, %v74, %v98
  %v107 = vsel %vm105, %v75, %v99
  %109 = vset.pattern.permute.xlu0 0
  %110 = vperm.xlu0 %109, %v50
  %v111 = vpop.permute.xlu0 %110
  %vm113 = vcmask 97280
  %v115 = vsel %vm113, %v49, 0
  %v117 = vsel %vm105, %v103, 0
  %v119 = vsel %vm105, %v104, 0
  %121 = vmatpush.msra.mxu0 0.0
  %122 = vmatpush.msra.mxu0 0.0
  %123 = vmatpush.msra.mxu0 0.0
  %124 = vmatpush.msra.mxu0 0.0
  %125 = vmatpush.msra.mxu0 0.0
  %126 = vmatpush.msra.mxu0 0.0
  %127 = vmatpush.msra.mxu0 0.0
  %128 = vmatpush.msra.mxu0 0.0
  %129 = vmatpush.msra.mxu0 0.0
  %130 = vmatpush.msra.mxu0 0.0
  %131 = vmatpush.msra.mxu0 0.0
  %132 = vmatpush.msra.mxu0 0.0
  %133 = vmatpush.msra.mxu0 0.0
  %134 = vmatpush.msra.mxu0 0.0
  %135 = vmatpush.msra.mxu0 %v117
  %136 = vmatpush.msra.mxu0 %v106
  %137 = vmatmul.f32.gmra.mxu0 %v115
  %v138 = vpop.f32.mrf.mxu0
  %v139 = vadd.f32 %v111, %v138
  %140 = vdwg.mxu0
  %141 = vmatpush.msra.mxu0 0.0
  %142 = vmatpush.msra.mxu0 0.0
  %143 = vmatpush.msra.mxu0 0.0
  %144 = vmatpush.msra.mxu0 0.0
  %145 = vmatpush.msra.mxu0 0.0
  %146 = vmatpush.msra.mxu0 0.0
  %147 = vmatpush.msra.mxu0 0.0
  %148 = vmatpush.msra.mxu0 0.0
  %149 = vmatpush.msra.mxu0 0.0
  %150 = vmatpush.msra.mxu0 0.0
  %151 = vmatpush.msra.mxu0 0.0
  %152 = vmatpush.msra.mxu0 0.0
  %153 = vmatpush.msra.mxu0 0.0
  %154 = vmatpush.msra.mxu0 0.0
  %155 = vmatpush.msra.mxu0 %v119
  %156 = vmatpush.msra.mxu0 %v107
  %157 = vmatmul.f32.gmra.mxu0 %v115
  %v158 = vpop.f32.mrf.mxu0
  %v159 = vadd.f32 %v111, %v158
  %160 = vdwg.mxu0
  %vm161 = vcmp.ge.f32.partialorder %v139, 0.0
  %vm162 = vcmp.ge.f32.partialorder %v159, 0.0
  %v163 = vmul.f32 %v139, 0.01
  %v164 = vmul.f32 %v159, 0.01
  %v165 = vsel %vm161, %v139, %v163
  %v166 = vsel %vm162, %v159, %v164
  %v167 = vmul.f32 %v165, %v47
  %168 = vadd.xlane.f32.xlu0 %v167
  %v169 = vpop.xlane.xlu0 %168
  %v170 = vmul.f32 %v169, 0.008474576
  %v171 = vsub.f32 %v165, %v170
  %v172 = vmul.f32 %v171, %v47
  %v173 = vmul.f32 %v172, %v172
  %174 = vadd.xlane.f32.xlu0 %v173
  %v175 = vpop.xlane.xlu0 %174
  %v176 = vmul.f32 %v175, 0.008474576
  %v177 = vadd.f32 %v176, 1e-05
  %v178 = vrsqrt.pop %v177
  %v179 = vmul.f32 %v178, %v177
  %v180 = vmul.f32 %v179, %v178
  %v181 = vmul.f32 0.5, %v180
  %v182 = vsub.f32 1.5, %v181
  %v183 = vmul.f32 %v178, %v182
  %vm184 = vweird.f32 %v177
  %vm185 = vweird.f32 %v178
  %vm186 = vmor %vm184, %vm185
  %v187 = vsel %vm186, %v178, %v183
  %v188 = vmul.f32 %v171, %v187
  %v189 = vmul.f32 %v166, %v47
  %190 = vadd.xlane.f32.xlu0 %v189
  %v191 = vpop.xlane.xlu0 %190
  %v192 = vmul.f32 %v191, 0.008474576
  %v193 = vsub.f32 %v166, %v192
  %v194 = vmul.f32 %v193, %v47
  %v195 = vmul.f32 %v194, %v194
  %196 = vadd.xlane.f32.xlu0 %v195
  %v197 = vpop.xlane.xlu0 %196
  %v198 = vmul.f32 %v197, 0.008474576
  %v199 = vadd.f32 %v198, 1e-05
  %v200 = vrsqrt.pop %v199
  %v201 = vmul.f32 %v200, %v199
  %v202 = vmul.f32 %v201, %v200
  %v203 = vmul.f32 0.5, %v202
  %v204 = vsub.f32 1.5, %v203
  %v205 = vmul.f32 %v200, %v204
  %vm206 = vweird.f32 %v199
  %vm207 = vweird.f32 %v200
  %vm208 = vmor %vm206, %vm207
  %v209 = vsel %vm208, %v200, %v205
  %v210 = vmul.f32 %v193, %v209
  %v212 = vperm.slane %v51, 0
  %v213 = vperm.slane %v51, 1
  %v216 = vmul.f32 %v188, %v212
  %v217 = vmul.f32 %v210, %v213
  %v219 = vperm.slane %v52, 0
  %v220 = vperm.slane %v52, 1
  %v223 = vadd.f32 %v216, %v219
  %v224 = vadd.f32 %v217, %v220
  %226 = vset.pattern.permute.xlu0 0
  %227 = vperm.xlu0 %226, %v54
  %v228 = vpop.permute.xlu0 %227
  %230 = vst [vmem:[#allocation1] ss:$2 sm:$0xff] %v48
  %v231 = vld.sshfl [vmem:[#allocation1] sm:$0xff pattern:$0x75316420]
  %v232 = vld.sshfl [vmem:[#allocation1 + $0x8] sm:$0xff pattern:$0x75316420]
  %vm233 = vcmask 31744
  %v235 = vsel %vm233, %v53, 0
  %v237 = vsel %vm105, %v231, 0
  %v239 = vsel %vm105, %v232, 0
  %241 = vmatpush.msra.mxu0 0.0
  %242 = vmatpush.msra.mxu0 0.0
  %243 = vmatpush.msra.mxu0 0.0
  %244 = vmatpush.msra.mxu0 0.0
  %245 = vmatpush.msra.mxu0 0.0
  %246 = vmatpush.msra.mxu0 0.0
  %247 = vmatpush.msra.mxu0 0.0
  %248 = vmatpush.msra.mxu0 0.0
  %249 = vmatpush.msra.mxu0 0.0
  %250 = vmatpush.msra.mxu0 0.0
  %251 = vmatpush.msra.mxu0 0.0
  %252 = vmatpush.msra.mxu0 0.0
  %253 = vmatpush.msra.mxu0 0.0
  %254 = vmatpush.msra.mxu0 0.0
  %255 = vmatpush.msra.mxu0 0.0
  %256 = vmatpush.msra.mxu0 %v237
  %257 = vmatmul.f32.gmra.mxu0 %v235
  %v258 = vpop.f32.mrf.mxu0
  %v259 = vadd.f32 %v228, %v258
  %260 = vdwg.mxu0
  %261 = vmatpush.msra.mxu0 0.0
  %262 = vmatpush.msra.mxu0 0.0
  %263 = vmatpush.msra.mxu0 0.0
  %264 = vmatpush.msra.mxu0 0.0
  %265 = vmatpush.msra.mxu0 0.0
  %266 = vmatpush.msra.mxu0 0.0
  %267 = vmatpush.msra.mxu0 0.0
  %268 = vmatpush.msra.mxu0 0.0
  %269 = vmatpush.msra.mxu0 0.0
  %270 = vmatpush.msra.mxu0 0.0
  %271 = vmatpush.msra.mxu0 0.0
  %272 = vmatpush.msra.mxu0 0.0
  %273 = vmatpush.msra.mxu0 0.0
  %274 = vmatpush.msra.mxu0 0.0
  %275 = vmatpush.msra.mxu0 0.0
  %276 = vmatpush.msra.mxu0 %v239
  %277 = vmatmul.f32.gmra.mxu0 %v235
  %v278 = vpop.f32.mrf.mxu0
  %v279 = vadd.f32 %v228, %v278
  %280 = vdwg.mxu0
  %v281 = vadd.f32 %v223, %v259
  %v282 = vadd.f32 %v224, %v279
  %v283 = vmax.f32 %v281, 0.0
  %v284 = vmax.f32 %v282, 0.0
  %v285 = vsel %vm43, 1, 0
  %v286 = vsel %vm44, 1, 0
  %vm287 = vcmp.eq.s32.totalorder %v285, 1
  %vm288 = vcmp.eq.s32.totalorder %v286, 1
  %v289 = vsel %vm287, %v283, 0.0
  %v290 = vsel %vm288, %v284, 0.0
  %v291 = vld [vmem:[%s7] sm:$0xff]
  %v292 = vld [vmem:[%s8] sm:$0xff]
  %v293 = vld [vmem:[%s9] sm:$0x3]
  %v294 = vld [vmem:[%s10] sm:$0x3]
  %295 = vrot.lane.b32.xlu0 %v289, 4
  %v296 = vpop.permute.xlu0 %295
  %297 = vrot.lane.b32.xlu0 %v290, 4
  %v298 = vpop.permute.xlu0 %297
  %vm299 = vcmp.lt.s32.totalorder %v39, 4
  %v300 = vsel %vm299, %v296, %v298
  %v301 = vsel %vm299, %v298, %v296
  %vm302 = vcmp.ge.s32.totalorder %v41, 4
  %vm303 = vcmp.ge.s32.totalorder %v42, 4
  %v304 = vsel %vm302, 1, 0
  %v305 = vsel %vm303, 1, 0
  %vm306 = vcmp.eq.s32.totalorder %v304, 1
  %vm307 = vcmp.eq.s32.totalorder %v305, 1
  %v308 = vsel %vm306, %v301, 0.0
  %v309 = vsel %vm307, %v300, 0.0
  %310 = vrot.lane.b32.xlu0 %v289, 2
  %v311 = vpop.permute.xlu0 %310
  %312 = vrot.lane.b32.xlu0 %v290, 2
  %v313 = vpop.permute.xlu0 %312
  %v314 = vsel %vm65, %v311, %v313
  %v315 = vsel %vm65, %v313, %v311
  %v316 = vsel %vm72, %v315, 0.0
  %v317 = vsel %vm73, %v314, 0.0
  %319 = vset.pattern.permute.xlu0 0
  %320 = vperm.xlu0 %319, %v292
  %v321 = vpop.permute.xlu0 %320
  %vm323 = vcmask 195584
  %v325 = vsel %vm323, %v291, 0
  %327 = vmatpush.msra.mxu0 0.0
  %328 = vmatpush.msra.mxu0 0.0
  %329 = vmatpush.msra.mxu0 0.0
  %330 = vmatpush.msra.mxu0 0.0
  %331 = vmatpush.msra.mxu0 0.0
  %332 = vmatpush.msra.mxu0 0.0
  %333 = vmatpush.msra.mxu0 0.0
  %334 = vmatpush.msra.mxu0 0.0
  %335 = vmatpush.msra.mxu0 0.0
  %336 = vmatpush.msra.mxu0 0.0
  %337 = vmatpush.msra.mxu0 0.0
  %338 = vmatpush.msra.mxu0 0.0
  %339 = vmatpush.msra.mxu0 0.0
  %340 = vmatpush.msra.mxu0 %v289
  %341 = vmatpush.msra.mxu0 %v316
  %342 = vmatpush.msra.mxu0 %v308
  %343 = vmatmul.f32.gmra.mxu0 %v325
  %v344 = vpop.f32.mrf.mxu0
  %v345 = vadd.f32 %v321, %v344
  %346 = vdwg.mxu0
  %347 = vmatpush.msra.mxu0 0.0
  %348 = vmatpush.msra.mxu0 0.0
  %349 = vmatpush.msra.mxu0 0.0
  %350 = vmatpush.msra.mxu0 0.0
  %351 = vmatpush.msra.mxu0 0.0
  %352 = vmatpush.msra.mxu0 0.0
  %353 = vmatpush.msra.mxu0 0.0
  %354 = vmatpush.msra.mxu0 0.0
  %355 = vmatpush.msra.mxu0 0.0
  %356 = vmatpush.msra.mxu0 0.0
  %357 = vmatpush.msra.mxu0 0.0
  %358 = vmatpush.msra.mxu0 0.0
  %359 = vmatpush.msra.mxu0 0.0
  %360 = vmatpush.msra.mxu0 %v290
  %361 = vmatpush.msra.mxu0 %v317
  %362 = vmatpush.msra.mxu0 %v309
  %363 = vmatmul.f32.gmra.mxu0 %v325
  %v364 = vpop.f32.mrf.mxu0
  %v365 = vadd.f32 %v321, %v364
  %366 = vdwg.mxu0
  %vm367 = vcmp.ge.f32.partialorder %v345, 0.0
  %vm368 = vcmp.ge.f32.partialorder %v365, 0.0
  %v369 = vmul.f32 %v345, 0.01
  %v370 = vmul.f32 %v365, 0.01
  %v371 = vsel %vm367, %v345, %v369
  %v372 = vsel %vm368, %v365, %v370
  %v373 = vmul.f32 %v371, %v47
  %374 = vadd.xlane.f32.xlu0 %v373
  %v375 = vpop.xlane.xlu0 %374
  %v376 = vmul.f32 %v375, 0.008474576
  %v377 = vsub.f32 %v371, %v376
  %v378 = vmul.f32 %v377, %v47
  %v379 = vmul.f32 %v378, %v378
  %380 = vadd.xlane.f32.xlu0 %v379
  %v381 = vpop.xlane.xlu0 %380
  %v382 = vmul.f32 %v381, 0.008474576
  %v383 = vadd.f32 %v382, 1e-05
  %v384 = vrsqrt.pop %v383
  %v385 = vmul.f32 %v384, %v383
  %v386 = vmul.f32 %v385, %v384
  %v387 = vmul.f32 0.5, %v386
  %v388 = vsub.f32 1.5, %v387
  %v389 = vmul.f32 %v384, %v388
  %vm390 = vweird.f32 %v383
  %vm391 = vweird.f32 %v384
  %vm392 = vmor %vm390, %vm391
  %v393 = vsel %vm392, %v384, %v389
  %v394 = vmul.f32 %v377, %v393
  %v395 = vmul.f32 %v372, %v47
  %396 = vadd.xlane.f32.xlu0 %v395
  %v397 = vpop.xlane.xlu0 %396
  %v398 = vmul.f32 %v397, 0.008474576
  %v399 = vsub.f32 %v372, %v398
  %v400 = vmul.f32 %v399, %v47
  %v401 = vmul.f32 %v400, %v400
  %402 = vadd.xlane.f32.xlu0 %v401
  %v403 = vpop.xlane.xlu0 %402
  %v404 = vmul.f32 %v403, 0.008474576
  %v405 = vadd.f32 %v404, 1e-05
  %v406 = vrsqrt.pop %v405
  %v407 = vmul.f32 %v406, %v405
  %v408 = vmul.f32 %v407, %v406
  %v409 = vmul.f32 0.5, %v408
  %v410 = vsub.f32 1.5, %v409
  %v411 = vmul.f32 %v406, %v410
  %vm412 = vweird.f32 %v405
  %vm413 = vweird.f32 %v406
  %vm414 = vmor %vm412, %vm413
  %v415 = vsel %vm414, %v406, %v411
  %v416 = vmul.f32 %v399, %v415
  %v418 = vperm.slane %v293, 0
  %v419 = vperm.slane %v293, 1
  %v422 = vmul.f32 %v394, %v418
  %v423 = vmul.f32 %v416, %v419
  %v425 = vperm.slane %v294, 0
  %v426 = vperm.slane %v294, 1
  %v429 = vadd.f32 %v422, %v425
  %v430 = vadd.f32 %v423, %v426
  %v431 = vadd.f32 %v429, %v289
  %v432 = vadd.f32 %v430, %v290
  %v433 = vmax.f32 %v431, 0.0
  %v434 = vmax.f32 %v432, 0.0
  %v435 = vsel %vm287, %v433, 0.0
  %v436 = vsel %vm288, %v434, 0.0
  %437 = vst [vmem:[%s11] sm:$0xff] %v435
  %438 = vst [vmem:[%s11 + $0x8] sm:$0xff] %v436
  // Predicated region
  $region46: #{temporal_conv_net.1} parent=0 // pred_check
    _
  $region47: #{temporal_conv_net.1} parent=0 // pred_check_branch
    %440 = sbr.rel (0) target = $region49
  $region48: #{temporal_conv_net.1} parent=0 // pred_region
    _
  $region49: #{temporal_conv_net.1} parent=0 // pred_fallthru
    _
  // Predicated region
  $region50: #{temporal_conv_net.1} parent=0 // pred_check
    _
  $region51: #{temporal_conv_net.1} parent=0 // pred_check_branch
    %442 = sbr.rel (0) target = $region53
  $region52: #{temporal_conv_net.1} parent=0 // pred_region
    _
  $region53: #{temporal_conv_net.1} parent=0 // pred_fallthru
    _

</llo_original>
